<compile_context>
chip_gen: v5e
topology: v5e:2x2
jax: 0.10.0
libtpu: 0.0.40
codegen_flags: <defaults>
</compile_context>

<pallas_src>
from functools import partial

import numpy as np
import jax
import jax.numpy as jnp
from jax.experimental import pallas as pl
from jax.experimental.pallas import tpu as pltpu

IN_DIM = 10
HIDDEN = 200
SHAPE = (2, 4, 16, 16)            # self.shape in the PyTorch module
OUT_DIM = int(np.prod(SHAPE))     # 2048


def _variable_network_kernel(w1_ref, b1_ref, w2_ref, b2_ref, out_ref):
    # self.var == ones([1, 10])  =>  var @ W1 == column-sum of W1.
    h = jnp.tanh(jnp.sum(w1_ref[...], axis=0, keepdims=True) + b1_ref[...])
    # GEMV tile: [1, HIDDEN] @ [HIDDEN, TN] with bf16 inputs, f32 accumulation.
    o = jnp.dot(h.astype(w2_ref.dtype), w2_ref[...],
                preferred_element_type=jnp.float32)
    out_ref[...] = (o + b2_ref[...].astype(jnp.float32)).astype(out_ref.dtype)


def _pick_tile(out_dim):
    # Largest lane-dense tile (multiple of 128) that still leaves >= 2 grid
    # steps (so v7x's two TensorCores both get work and the W2 DMA pipelines);
    # otherwise one full-width tile.
    for tn in (2048, 1024, 512, 256, 128):
        if out_dim % tn == 0 and out_dim // tn >= 2:
            return tn
    return out_dim


@partial(jax.jit, static_argnames=("shape",))
def variable_network(w1, b1, w2, b2, shape=SHAPE):
    """w1:[10,200] f32  b1:[1,200] f32  w2:[200,prod(shape)] bf16  b2:[1,prod(shape)] bf16"""
    out_dim = int(np.prod(shape))
    tn = _pick_tile(out_dim)
    grid = (out_dim // tn,)

    cost = pl.CostEstimate(
        flops=2 * HIDDEN * out_dim + IN_DIM * HIDDEN,
        transcendentals=HIDDEN * grid[0],
        bytes_accessed=(w1.size * w1.dtype.itemsize + b1.size * b1.dtype.itemsize
                        + w2.size * w2.dtype.itemsize + b2.size * b2.dtype.itemsize
                        + out_dim * 4),
    )

    flat = pl.pallas_call(
        _variable_network_kernel,
        out_shape=jax.ShapeDtypeStruct((1, out_dim), jnp.float32),
        grid=grid,
        in_specs=[
            pl.BlockSpec((IN_DIM, HIDDEN), lambda j: (0, 0)),   # W1 (constant idx -> fetched once)
            pl.BlockSpec((1, HIDDEN), lambda j: (0, 0)),        # b1 (constant idx -> fetched once)
            pl.BlockSpec((HIDDEN, tn), lambda j: (0, j)),       # W2 tile (double-buffered)
            pl.BlockSpec((1, tn), lambda j: (0, j)),            # b2 tile
        ],
        out_specs=pl.BlockSpec((1, tn), lambda j: (0, j)),      # lane-dense output tile
        compiler_params=pltpu.CompilerParams(
            dimension_semantics=("parallel",)),                 # v7x: split N over 2 TCs
        cost_estimate=cost,
    )(w1, b1, w2, b2)

    # Glue: reshape to the module's target shape (row-major, == torch.reshape).
    return flat.reshape(shape)


def init_params(key):
    """Deterministic synthetic parameters with the shapes of nn.Linear(10,200)
    and nn.Linear(200, prod(shape)), stored pre-transposed as [in, out].
    W2/b2 are kept in bfloat16 (bandwidth-dominant weight), W1/b1 in float32."""
    k1, k2, k3, k4 = jax.random.split(key, 4)
    lim1 = 1.0 / np.sqrt(IN_DIM)
    lim2 = 1.0 / np.sqrt(HIDDEN)
    w1 = jax.random.uniform(k1, (IN_DIM, HIDDEN), jnp.float32, -lim1, lim1)
    b1 = jax.random.uniform(k2, (1, HIDDEN), jnp.float32, -lim1, lim1)
    w2 = jax.random.uniform(k3, (HIDDEN, OUT_DIM), jnp.float32, -lim2, lim2).astype(jnp.bfloat16)
    b2 = jax.random.uniform(k4, (1, OUT_DIM), jnp.float32, -lim2, lim2).astype(jnp.bfloat16)
    return w1, b1, w2, b2


if __name__ == "__main__":
    key = jax.random.PRNGKey(0)
    w1, b1, w2, b2 = init_params(key)

    # forward(x) ignores x; construct it only to mirror the module's call signature.
    x = jax.random.normal(jax.random.PRNGKey(1), SHAPE, jnp.float32)  # unused by forward
    var = jnp.ones((1, IN_DIM), jnp.float32)                          # self.var

    out = variable_network(w1, b1, w2, b2, SHAPE)
    out = jax.block_until_ready(out)

    # Reference check in plain JAX (f32 math on the same bf16-quantized weights).
    ref = (jnp.tanh(var @ w1 + b1) @ w2.astype(jnp.float32)
           + b2.astype(jnp.float32)).reshape(SHAPE)
    assert out.shape == SHAPE
    np.testing.assert_allclose(np.asarray(out), np.asarray(ref), rtol=2e-2, atol=2e-2)

    print("KERNEL_OK")
</pallas_src>

<mosaic_0001>
module attributes {stable_mosaic.version = 11 : i64} {
  func.func @_variable_network_kernel(%arg0: i32, %arg1: memref<10x200xf32, #tpu.memory_space<vmem>>, %arg2: memref<1x200xf32, #tpu.memory_space<vmem>>, %arg3: memref<200x1024xbf16, #tpu.memory_space<vmem>>, %arg4: memref<1x1024xbf16, #tpu.memory_space<vmem>>, %arg5: memref<1x1024xf32, #tpu.memory_space<vmem>>) attributes {dimension_semantics = [#tpu.dimension_semantics<parallel>], iteration_bounds = array<i64: 2>, scalar_prefetch = 0 : i64, scratch_operands = 0 : i64, tpu.core_type = #tpu.core_type<tc>, window_params = [{pipeline_mode = #tpu.pipeline_mode<synchronous>, transform_indices = @transform_0, window_bounds = array<i64: 10, 200>}, {pipeline_mode = #tpu.pipeline_mode<synchronous>, transform_indices = @transform_1, window_bounds = array<i64: 1, 200>}, {transform_indices = @transform_2, window_bounds = array<i64: 200, 1024>}, {transform_indices = @transform_3, window_bounds = array<i64: 1, 1024>}, {transform_indices = @transform_4, window_bounds = array<i64: 1, 1024>}]} {
    %c0 = arith.constant 0 : index
    %c0_0 = arith.constant 0 : index
    %0 = vector.load %arg1[%c0, %c0_0] : memref<10x200xf32, #tpu.memory_space<vmem>>, vector<10x200xf32>
    %cst = arith.constant dense<0.000000e+00> : vector<200xf32>
    %1 = vector.multi_reduction <add>, %0, %cst [0] : vector<10x200xf32> to vector<200xf32>
    %2 = vector.shape_cast %1 : vector<200xf32> to vector<1x200xf32>
    %c0_1 = arith.constant 0 : index
    %c0_2 = arith.constant 0 : index
    %3 = vector.load %arg2[%c0_1, %c0_2] : memref<1x200xf32, #tpu.memory_space<vmem>>, vector<1x200xf32>
    %4 = arith.addf %2, %3 : vector<1x200xf32>
    %5 = math.tanh %4 : vector<1x200xf32>
    %6 = arith.truncf %5 : vector<1x200xf32> to vector<1x200xbf16>
    %c0_3 = arith.constant 0 : index
    %c0_4 = arith.constant 0 : index
    %7 = vector.load %arg3[%c0_3, %c0_4] : memref<200x1024xbf16, #tpu.memory_space<vmem>>, vector<200x1024xbf16>
    %cst_5 = arith.constant dense<0.000000e+00> : vector<1x1024xf32>
    %8 = tpu.matmul %6, %7, %cst_5 {dimension_numbers = #tpu.dot_dimension_numbers<[1], [0], [0], [1], [0, 0, 1, 1], [], []>} : vector<1x200xbf16>, vector<200x1024xbf16>, vector<1x1024xf32> -> vector<1x1024xf32>
    %c0_6 = arith.constant 0 : index
    %c0_7 = arith.constant 0 : index
    %9 = vector.load %arg4[%c0_6, %c0_7] : memref<1x1024xbf16, #tpu.memory_space<vmem>>, vector<1x1024xbf16>
    %10 = arith.extf %9 : vector<1x1024xbf16> to vector<1x1024xf32>
    %11 = arith.addf %8, %10 : vector<1x1024xf32>
    %c0_8 = arith.constant 0 : index
    %c0_9 = arith.constant 0 : index
    %12 = vector.load %arg5[%c0_8, %c0_9] : memref<1x1024xf32, #tpu.memory_space<vmem>>, vector<1x1024xf32>
    tpu.vector_store %arg5[%c0_8, %c0_9], %11 {strides = array<i32>} : memref<1x1024xf32, #tpu.memory_space<vmem>>, vector<1x1024xf32>,
    return
  }
  func.func @transform_0(%arg0: i32) -> (i32, i32) {
    %c0_i32 = arith.constant 0 : i32
    %c0_i32_0 = arith.constant 0 : i32
    %c0_i32_1 = arith.constant 0 : i32
    return %c0_i32, %c0_i32_0 : i32, i32
  }
  func.func @transform_1(%arg0: i32) -> (i32, i32) {
    %c0_i32 = arith.constant 0 : i32
    %c0_i32_0 = arith.constant 0 : i32
    %c0_i32_1 = arith.constant 0 : i32
    return %c0_i32, %c0_i32_0 : i32, i32
  }
  func.func @transform_2(%arg0: i32) -> (i32, i32) {
    %c0_i32 = arith.constant 0 : i32
    %c0_i32_0 = arith.constant 0 : i32
    return %c0_i32, %arg0 : i32, i32
  }
  func.func @transform_3(%arg0: i32) -> (i32, i32) {
    %c0_i32 = arith.constant 0 : i32
    %c0_i32_0 = arith.constant 0 : i32
    return %c0_i32, %arg0 : i32, i32
  }
  func.func @transform_4(%arg0: i32) -> (i32, i32) {
    %c0_i32 = arith.constant 0 : i32
    %c0_i32_0 = arith.constant 0 : i32
    return %c0_i32, %arg0 : i32, i32
  }
}

</mosaic_0001>

<llo_original>
// kernel: variable_network.1
$region0: #{variable_network.1}
  #allocation0 [shape = 'u32[]', space=smem, size = 0x4, offset = 0x4, fixed_abs, tag = 'smem constant byte address 0x4 - core index']
  #allocation1 [shape = 'u32[72,128]{1,0:T(1,128)}', space=vmem, size = 0x9000, scoped, tag = 'internal scratch']
  %s0 = inlined_call_operand.hbm [shape: f32[10,200], index: 0, kind: input, shape index: {}]
  %s1 = inlined_call_operand.hbm [shape: f32[1,200], index: 1, kind: input, shape index: {}]
  %s2 = inlined_call_operand.hbm [shape: bf16[200,2048], index: 2, kind: input, shape index: {}]
  %s3 = inlined_call_operand.hbm [shape: bf16[1,2048], index: 3, kind: input, shape index: {}]
  %s4 = inlined_call_operand.vmem [shape: f32[1,2048], index: 4, kind: output, shape index: {}]
  %s5 = sld [smem:[#allocation0]]
  $region65: #{variable_network.1} parent=0
    _
  %s7 = ssub.s32 1, %s5
  %s8 = scalar_select 0, %s7, %s5
  $region1: #{variable_network.1} parent=0
    #allocation2 [shape = 'u8[16384]{0}', space=vmem, size = 0x4000, scoped, tag = 'input window, operand 0, single buffered']
    #allocation3 [shape = 's32[2]{0}', space=sflag, size = 0x8, scoped, tag = 'scoped memory for variable_network.1']
    #allocation4 [shape = 'u8[1024]{0}', space=vmem, size = 0x400, scoped, tag = 'input window, operand 1, single buffered']
    #allocation5 [shape = 's32[1]{0}', space=sflag, size = 0x4, scoped, tag = 'scoped memory for variable_network.1']
    #allocation6 [shape = 'u8[819200]{0}', space=vmem, size = 0xc8000, scoped, tag = 'input window, operand 2']
    #allocation7 [shape = 'u8[8192]{0}', space=vmem, size = 0x2000, scoped, tag = 'input window, operand 3']
    %9 = vsyncpa [#allocation3], 0
    %10 = vsyncpa [#allocation5], 0
    loop: start=0, step=1, limit=4
    $region2: #{variable_network.1} parent=1 // loop_pre_header
      _
    $region3: #{variable_network.1} parent=1 // loop_header
      %s12 = sphi 0, %s16
      %p13 = scmp.ge.s32.totalorder %s12, 4
      %s20 = sphi 0, %s20
      %s22 = sphi 0, %s20
      %s23 = sphi 0, %s22
      %s37 = sphi 0, %s23
      %s41 = sphi 0, %s41
      %s43 = sphi 0, %s41
      %s44 = sphi 0, %s43
      %s58 = sphi 0, %s44
      %s64 = sphi 0, %s66
      %s67 = sphi 0, %s64
      %s68 = sphi 0, %s67
      %s84 = sphi 0, %s68
      %s90 = sphi 0, %s92
      %s93 = sphi 0, %s90
      %s94 = sphi 0, %s93
      %s110 = sphi 0, %s94
      %s116 = sphi 0, %s118
      %s119 = sphi 0, %s116
      %s120 = sphi 0, %s119
      %s136 = sphi 0, %s120
    $region4: #{variable_network.1} parent=1 // loop_header_branch
      %15 = sbr.rel (%p13) target = $region8
    $region5: #{variable_network.1} parent=1 // loop_body
      %s17 = ssub.s32 %s12, 1
      %s18 = ssub.s32 %s12, 2
      %s19 = sadd.s32 %s12, 1
      %s21 = sadd.s32 %s20, 1
      %p24 = scmp.eq.s32.totalorder %s12, 1
      %p25 = scmp.ne.s32.totalorder %s20, %s22
      %p26 = scmp.eq.s32.totalorder %s12, 0
      %p27 = por %p25, %p26
      %p28 = scmp.ne.s32.totalorder %s20, %s22
      %p29 = scmp.eq.s32.totalorder %s17, 1
      %p30 = por %p28, %p29
      %p31 = scmp.ne.s32.totalorder %s22, %s23
      %p32 = scmp.eq.s32.totalorder %s17, 0
      %p33 = por %p31, %p32
      %p34 = scmp.ne.s32.totalorder %s22, %s23
      %p35 = scmp.eq.s32.totalorder %s18, 1
      %p36 = por %p34, %p35
      %p38 = scmp.ne.s32.totalorder %s23, %s37
      %p39 = scmp.eq.s32.totalorder %s18, 0
      %p40 = por %p38, %p39
      %s42 = sadd.s32 %s41, 1
      %p45 = scmp.eq.s32.totalorder %s12, 1
      %p46 = scmp.ne.s32.totalorder %s41, %s43
      %p47 = scmp.eq.s32.totalorder %s12, 0
      %p48 = por %p46, %p47
      %p49 = scmp.ne.s32.totalorder %s41, %s43
      %p50 = scmp.eq.s32.totalorder %s17, 1
      %p51 = por %p49, %p50
      %p52 = scmp.ne.s32.totalorder %s43, %s44
      %p53 = scmp.eq.s32.totalorder %s17, 0
      %p54 = por %p52, %p53
      %p55 = scmp.ne.s32.totalorder %s43, %s44
      %p56 = scmp.eq.s32.totalorder %s18, 1
      %p57 = por %p55, %p56
      %p59 = scmp.ne.s32.totalorder %s44, %s58
      %p60 = scmp.eq.s32.totalorder %s18, 0
      %p61 = por %p59, %p60
      %s62 = ssub.s32 %s12, %s19
      %p63 = scmp.eq.s32.totalorder %s62, 0
      %s65 = sadd.s32 %s64, 1
      %s66 = scalar_select %p63, %s64, %s65
      %p69 = pneg %p63
      %p70 = scmp.eq.s32.totalorder %s12, 1
      %p71 = por %p69, %p70
      %p72 = scmp.ne.s32.totalorder %s64, %s67
      %p73 = scmp.eq.s32.totalorder %s12, 0
      %p74 = por %p72, %p73
      %p75 = scmp.ne.s32.totalorder %s64, %s67
      %p76 = scmp.eq.s32.totalorder %s17, 1
      %p77 = por %p75, %p76
      %p78 = scmp.ne.s32.totalorder %s67, %s68
      %p79 = scmp.eq.s32.totalorder %s17, 0
      %p80 = por %p78, %p79
      %p81 = scmp.ne.s32.totalorder %s67, %s68
      %p82 = scmp.eq.s32.totalorder %s18, 1
      %p83 = por %p81, %p82
      %p85 = scmp.ne.s32.totalorder %s68, %s84
      %p86 = scmp.eq.s32.totalorder %s18, 0
      %p87 = por %p85, %p86
      %s88 = ssub.s32 %s12, %s19
      %p89 = scmp.eq.s32.totalorder %s88, 0
      %s91 = sadd.s32 %s90, 1
      %s92 = scalar_select %p89, %s90, %s91
      %p95 = pneg %p89
      %p96 = scmp.eq.s32.totalorder %s12, 1
      %p97 = por %p95, %p96
      %p98 = scmp.ne.s32.totalorder %s90, %s93
      %p99 = scmp.eq.s32.totalorder %s12, 0
      %p100 = por %p98, %p99
      %p101 = scmp.ne.s32.totalorder %s90, %s93
      %p102 = scmp.eq.s32.totalorder %s17, 1
      %p103 = por %p101, %p102
      %p104 = scmp.ne.s32.totalorder %s93, %s94
      %p105 = scmp.eq.s32.totalorder %s17, 0
      %p106 = por %p104, %p105
      %p107 = scmp.ne.s32.totalorder %s93, %s94
      %p108 = scmp.eq.s32.totalorder %s18, 1
      %p109 = por %p107, %p108
      %p111 = scmp.ne.s32.totalorder %s94, %s110
      %p112 = scmp.eq.s32.totalorder %s18, 0
      %p113 = por %p111, %p112
      %s114 = ssub.s32 %s12, %s19
      %p115 = scmp.eq.s32.totalorder %s114, 0
      %s117 = sadd.s32 %s116, 1
      %s118 = scalar_select %p115, %s116, %s117
      %p121 = pneg %p115
      %p122 = scmp.eq.s32.totalorder %s12, 1
      %p123 = por %p121, %p122
      %p124 = scmp.ne.s32.totalorder %s116, %s119
      %p125 = scmp.eq.s32.totalorder %s12, 0
      %p126 = por %p124, %p125
      %p127 = scmp.ne.s32.totalorder %s116, %s119
      %p128 = scmp.eq.s32.totalorder %s17, 1
      %p129 = por %p127, %p128
      %p130 = scmp.ne.s32.totalorder %s119, %s120
      %p131 = scmp.eq.s32.totalorder %s17, 0
      %p132 = por %p130, %p131
      %p133 = scmp.ne.s32.totalorder %s119, %s120
      %p134 = scmp.eq.s32.totalorder %s18, 1
      %p135 = por %p133, %p134
      %p137 = scmp.ne.s32.totalorder %s120, %s136
      %p138 = scmp.eq.s32.totalorder %s18, 0
      %p139 = por %p137, %p138
      %p140 = scmp.le.s32.totalorder 1, %s12
      %p141 = scmp.lt.s32.totalorder %s12, 3
      %p142 = pnand %p140, %p141
      %p143 = pneg %p142
      // Predicated region
      $region9: #{variable_network.1} parent=5 // pred_check
        _
      $region10: #{variable_network.1} parent=5 // pred_check_branch
        %145 = sbr.rel (%p142) target = $region12
      $region11: #{variable_network.1} parent=5 // pred_region
        %s146 = ssub.s32 %s12, 1
        // Predicated region
        $region13: #{variable_network.1} parent=11 // pred_check
          %p147 = pneg %p33
        $region14: #{variable_network.1} parent=11 // pred_check_branch
          %149 = sbr.rel (%p147) target = $region16
        $region15: #{variable_network.1} parent=11 // pred_region
          %151 = vsyncadd [#allocation3], 0
          %s152 = sshll.u32 %s0, 4
          %s153 = int_to_ptr.hbm [resolvable:$true] %s152
          %s154 = sshll.u32 [#allocation2], 4
          %s155 = int_to_ptr.vmem [resolvable:$true] %s154
          %160 = dma.hbm_to_vmem [thread:$0]  %s153, 512, %s155, [#allocation3], 256, 256, 16
        $region16: #{variable_network.1} parent=11 // pred_fallthru
          _
        // Predicated region
        $region17: #{variable_network.1} parent=11 // pred_check
          %p161 = pneg %p54
        $region18: #{variable_network.1} parent=11 // pred_check_branch
          %163 = sbr.rel (%p161) target = $region20
        $region19: #{variable_network.1} parent=11 // pred_region
          %165 = vsyncadd [#allocation5], 0
          %s167 = sshll.u32 %s1, 4
          %s168 = int_to_ptr.hbm [resolvable:$true] %s167
          %s169 = sshll.u32 [#allocation4], 4
          %s170 = int_to_ptr.vmem [resolvable:$true] %s169
          %172 = dma.hbm_to_vmem [thread:$0]  %s168, 32, %s170, [#allocation5]
        $region20: #{variable_network.1} parent=11 // pred_fallthru
          _
      $region12: #{variable_network.1} parent=5 // pred_fallthru
        _
      %p173 = scmp.lt.s32.totalorder %s12, 2
      // Predicated region
      $region21: #{variable_network.1} parent=5 // pred_check
        %p174 = pneg %p173
      $region22: #{variable_network.1} parent=5 // pred_check_branch
        %176 = sbr.rel (%p174) target = $region24
      $region23: #{variable_network.1} parent=5 // pred_region
        // Predicated region
        $region25: #{variable_network.1} parent=23 // pred_check
          %p177 = pneg %p74
        $region26: #{variable_network.1} parent=23 // pred_check_branch
          %179 = sbr.rel (%p177) target = $region28
        $region27: #{variable_network.1} parent=23 // pred_region
          %s180 = sand.u32 %s12, 1
          %s181 = scalar_lea.sflag [#allocation3], %s180
          %s182 = sand.u32 %s64, 1
          %s183 = smul.addr %s182, 800
          %s184 = scalar_lea.vmem [#allocation6], %s183
          %s185 = smul.u32 8, %s12
          %187 = vsyncadd %s181, 0
          %s188 = smul.addr %s185, 4
          %s189 = scalar_lea.hbm %s2, %s188
          %s190 = sshll.u32 %s189, 4
          %s191 = int_to_ptr.hbm [resolvable:$true] %s190
          %s192 = sshll.u32 %s184, 4
          %s193 = int_to_ptr.vmem [resolvable:$true] %s192
          %198 = dma.hbm_to_vmem [thread:$0]  %s191, 12800, %s193, %s181, 1024, 512, 32
        $region28: #{variable_network.1} parent=23 // pred_fallthru
          _
        // Predicated region
        $region29: #{variable_network.1} parent=23 // pred_check
          %p199 = pneg %p100
        $region30: #{variable_network.1} parent=23 // pred_check_branch
          %201 = sbr.rel (%p199) target = $region32
        $region31: #{variable_network.1} parent=23 // pred_region
          %s202 = sand.u32 %s12, 1
          %s203 = scalar_lea.sflag [#allocation3], %s202
          %s204 = sand.u32 %s90, 1
          %s205 = smul.addr %s204, 8
          %s206 = scalar_lea.vmem [#allocation7], %s205
          %s207 = smul.u32 8, %s12
          %209 = vsyncadd %s203, 0
          %s210 = scalar_lea.hbm %s3, %s207
          %s212 = sshll.u32 %s210, 4
          %s213 = int_to_ptr.hbm [resolvable:$true] %s212
          %s214 = sshll.u32 %s206, 4
          %s215 = int_to_ptr.vmem [resolvable:$true] %s214
          %217 = dma.hbm_to_vmem [thread:$0]  %s213, 128, %s215, %s203
        $region32: #{variable_network.1} parent=23 // pred_fallthru
          _
      $region24: #{variable_network.1} parent=5 // pred_fallthru
        _
      %p218 = scmp.le.s32.totalorder 1, %s12
      %p219 = scmp.lt.s32.totalorder %s12, 3
      %p220 = pnand %p218, %p219
      %p221 = pneg %p220
      // Predicated region
      $region33: #{variable_network.1} parent=5 // pred_check
        _
      $region34: #{variable_network.1} parent=5 // pred_check_branch
        %223 = sbr.rel (%p220) target = $region36
      $region35: #{variable_network.1} parent=5 // pred_region
        %s224 = ssub.s32 %s12, 1
        // Predicated region
        $region37: #{variable_network.1} parent=35 // pred_check
          %p225 = pneg %p33
        $region38: #{variable_network.1} parent=35 // pred_check_branch
          %227 = sbr.rel (%p225) target = $region40
        $region39: #{variable_network.1} parent=35 // pred_region
          %229 = dma.done [#allocation3], 512
        $region40: #{variable_network.1} parent=35 // pred_fallthru
          _
        // Predicated region
        $region41: #{variable_network.1} parent=35 // pred_check
          %p230 = pneg %p54
        $region42: #{variable_network.1} parent=35 // pred_check_branch
          %232 = sbr.rel (%p230) target = $region44
        $region43: #{variable_network.1} parent=35 // pred_region
          %234 = dma.done [#allocation5], 32
        $region44: #{variable_network.1} parent=35 // pred_fallthru
          _
        %s235 = sand.u32 %s17, 1
        %s236 = scalar_lea.sflag [#allocation3], %s235
        %s237 = sand.u32 %s67, 1
        %s238 = smul.addr %s237, 800
        %s239 = scalar_lea.vmem [#allocation6], %s238
        // Predicated region
        $region45: #{variable_network.1} parent=35 // pred_check
          %p240 = pneg %p80
        $region46: #{variable_network.1} parent=35 // pred_check_branch
          %242 = sbr.rel (%p240) target = $region48
        $region47: #{variable_network.1} parent=35 // pred_region
          %244 = dma.done %s236, 12800
        $region48: #{variable_network.1} parent=35 // pred_fallthru
          _
        %s245 = sand.u32 %s17, 1
        %s246 = scalar_lea.sflag [#allocation3], %s245
        %s247 = sand.u32 %s93, 1
        %s248 = smul.addr %s247, 8
        %s249 = scalar_lea.vmem [#allocation7], %s248
        // Predicated region
        $region49: #{variable_network.1} parent=35 // pred_check
          %p250 = pneg %p106
        $region50: #{variable_network.1} parent=35 // pred_check_branch
          %252 = sbr.rel (%p250) target = $region52
        $region51: #{variable_network.1} parent=35 // pred_region
          %254 = dma.done %s246, 128
        $region52: #{variable_network.1} parent=35 // pred_fallthru
          _
        %p255 = pneg %p33
        %p256 = pneg %p30
        %p257 = pneg %p54
        %p258 = pneg %p51
        %s259 = sand.u32 %s17, 1
        %s260 = scalar_lea.sflag [#allocation3], %s259
        %s261 = sand.u32 %s67, 1
        %s262 = smul.addr %s261, 800
        %s263 = scalar_lea.vmem [#allocation6], %s262
        %p264 = pneg %p80
        %p265 = pneg %p77
        %s266 = sand.u32 %s17, 1
        %s267 = scalar_lea.sflag [#allocation3], %s266
        %s268 = sand.u32 %s93, 1
        %s269 = smul.addr %s268, 8
        %s270 = scalar_lea.vmem [#allocation7], %s269
        %p271 = pneg %p106
        %p272 = pneg %p103
        %p273 = pneg %p132
        %p274 = pneg %p129
        %s275 = smul.u32 8, %s17
        %p276 = scmp.lt.s32.totalorder %s275, 15
        %s277 = scalar_select %p276, %s275, 15
        %s278 = scalar_lea.vmem %s4, %s277
        %s279 = smul.u32 8, %s17
        %s280 = smul.u32 8, %s17
        %s281 = smul.u32 8, %s17
        %p282 = scmp.lt.s32.totalorder %s281, 15
        %s283 = scalar_select %p282, %s281, 15
        %s284 = scalar_lea.vmem %s4, %s283
        %s285 = smul.u32 8, %s17
        %v287 = vld [vmem:[#allocation2] sm:$0xff]
        %v288 = vld [vmem:[#allocation2 + $0x8] sm:$0xff]
        %v289 = vld [vmem:[#allocation2 + $0x10] sm:$0x3]
        %v290 = vld [vmem:[#allocation2 + $0x18] sm:$0x3]
        %vm291 = vcmask 1041408
        %v292 = vsel %vm291, %v289, 0.0
        %v293 = vadd.f32 %v287, %v292
        %v294 = vrot.slane %v293, 4
        %v295 = vadd.f32 %v293, %v294
        %v296 = vrot.slane %v295, 2
        %v297 = vadd.f32 %v295, %v296
        %v298 = vrot.slane %v297, 1
        %v299 = vadd.f32 %v297, %v298
        %vm300 = vcmask 588800
        %v301 = vsel %vm300, %v288, 0.0
        %vm302 = vcmask 582656
        %v303 = vsel %vm302, %v290, 0.0
        %v304 = vadd.f32 %v301, %v303
        %v305 = vrot.slane %v304, 4
        %v306 = vadd.f32 %v304, %v305
        %v307 = vrot.slane %v306, 2
        %v308 = vadd.f32 %v306, %v307
        %v309 = vrot.slane %v308, 1
        %v310 = vadd.f32 %v308, %v309
        %v311 = vld [vmem:[#allocation4] sm:$0x3]
        %v313 = vperm.slane %v311, 0
        %v314 = vperm.slane %v311, 1
        %v317 = vadd.f32 %v299, %v313
        %v318 = vadd.f32 %v310, %v314
        %v319 = vtanh.pop %v317
        %v320 = vtanh.pop %v318
        %v321 = vpack.c.bf16 %v319, %v319
        %v322 = vpack.c.bf16 %v320, %v320
        %v323 = vld [vmem:[%s239] sm:$0xff]
        %v324 = vld [vmem:[%s239 + $0x8] sm:$0xff]
        %v325 = vld [vmem:[%s239 + $0x10] sm:$0xff]
        %v326 = vld [vmem:[%s239 + $0x18] sm:$0xff]
        %v327 = vld [vmem:[%s239 + $0x20] sm:$0xff]
        %v328 = vld [vmem:[%s239 + $0x28] sm:$0xff]
        %v329 = vld [vmem:[%s239 + $0x30] sm:$0xff]
        %v330 = vld [vmem:[%s239 + $0x38] sm:$0xff]
        %v331 = vld [vmem:[%s239 + $0x40] sm:$0xff]
        %v332 = vld [vmem:[%s239 + $0x48] sm:$0xff]
        %v333 = vld [vmem:[%s239 + $0x50] sm:$0xff]
        %v334 = vld [vmem:[%s239 + $0x58] sm:$0xff]
        %v335 = vld [vmem:[%s239 + $0x60] sm:$0xff]
        %v336 = vld [vmem:[%s239 + $0x68] sm:$0xff]
        %v337 = vld [vmem:[%s239 + $0x70] sm:$0xff]
        %v338 = vld [vmem:[%s239 + $0x78] sm:$0xff]
        %v339 = vld [vmem:[%s239 + $0x80] sm:$0xff]
        %v340 = vld [vmem:[%s239 + $0x88] sm:$0xff]
        %v341 = vld [vmem:[%s239 + $0x90] sm:$0xff]
        %v342 = vld [vmem:[%s239 + $0x98] sm:$0xff]
        %v343 = vld [vmem:[%s239 + $0xa0] sm:$0xff]
        %v344 = vld [vmem:[%s239 + $0xa8] sm:$0xff]
        %v345 = vld [vmem:[%s239 + $0xb0] sm:$0xff]
        %v346 = vld [vmem:[%s239 + $0xb8] sm:$0xff]
        %v347 = vld [vmem:[%s239 + $0xc0] sm:$0xff]
        %v348 = vld [vmem:[%s239 + $0xc8] sm:$0xff]
        %v349 = vld [vmem:[%s239 + $0xd0] sm:$0xff]
        %v350 = vld [vmem:[%s239 + $0xd8] sm:$0xff]
        %v351 = vld [vmem:[%s239 + $0xe0] sm:$0xff]
        %v352 = vld [vmem:[%s239 + $0xe8] sm:$0xff]
        %v353 = vld [vmem:[%s239 + $0xf0] sm:$0xff]
        %v354 = vld [vmem:[%s239 + $0xf8] sm:$0xff]
        %v355 = vld [vmem:[%s239 + $0x100] sm:$0xff]
        %v356 = vld [vmem:[%s239 + $0x108] sm:$0xff]
        %v357 = vld [vmem:[%s239 + $0x110] sm:$0xff]
        %v358 = vld [vmem:[%s239 + $0x118] sm:$0xff]
        %v359 = vld [vmem:[%s239 + $0x120] sm:$0xff]
        %v360 = vld [vmem:[%s239 + $0x128] sm:$0xff]
        %v361 = vld [vmem:[%s239 + $0x130] sm:$0xff]
        %v362 = vld [vmem:[%s239 + $0x138] sm:$0xff]
        %v363 = vld [vmem:[%s239 + $0x140] sm:$0xff]
        %v364 = vld [vmem:[%s239 + $0x148] sm:$0xff]
        %v365 = vld [vmem:[%s239 + $0x150] sm:$0xff]
        %v366 = vld [vmem:[%s239 + $0x158] sm:$0xff]
        %v367 = vld [vmem:[%s239 + $0x160] sm:$0xff]
        %v368 = vld [vmem:[%s239 + $0x168] sm:$0xff]
        %v369 = vld [vmem:[%s239 + $0x170] sm:$0xff]
        %v370 = vld [vmem:[%s239 + $0x178] sm:$0xff]
        %v371 = vld [vmem:[%s239 + $0x180] sm:$0xff]
        %v372 = vld [vmem:[%s239 + $0x188] sm:$0xff]
        %v373 = vld [vmem:[%s239 + $0x190] sm:$0xff]
        %v374 = vld [vmem:[%s239 + $0x198] sm:$0xff]
        %v375 = vld [vmem:[%s239 + $0x1a0] sm:$0xff]
        %v376 = vld [vmem:[%s239 + $0x1a8] sm:$0xff]
        %v377 = vld [vmem:[%s239 + $0x1b0] sm:$0xff]
        %v378 = vld [vmem:[%s239 + $0x1b8] sm:$0xff]
        %v379 = vld [vmem:[%s239 + $0x1c0] sm:$0xff]
        %v380 = vld [vmem:[%s239 + $0x1c8] sm:$0xff]
        %v381 = vld [vmem:[%s239 + $0x1d0] sm:$0xff]
        %v382 = vld [vmem:[%s239 + $0x1d8] sm:$0xff]
        %v383 = vld [vmem:[%s239 + $0x1e0] sm:$0xff]
        %v384 = vld [vmem:[%s239 + $0x1e8] sm:$0xff]
        %v385 = vld [vmem:[%s239 + $0x1f0] sm:$0xff]
        %v386 = vld [vmem:[%s239 + $0x1f8] sm:$0xff]
        %v387 = vld [vmem:[%s239 + $0x200] sm:$0xff]
        %v388 = vld [vmem:[%s239 + $0x208] sm:$0xff]
        %v389 = vld [vmem:[%s239 + $0x210] sm:$0xff]
        %v390 = vld [vmem:[%s239 + $0x218] sm:$0xff]
        %v391 = vld [vmem:[%s239 + $0x220] sm:$0xff]
        %v392 = vld [vmem:[%s239 + $0x228] sm:$0xff]
        %v393 = vld [vmem:[%s239 + $0x230] sm:$0xff]
        %v394 = vld [vmem:[%s239 + $0x238] sm:$0xff]
        %v395 = vld [vmem:[%s239 + $0x240] sm:$0xff]
        %v396 = vld [vmem:[%s239 + $0x248] sm:$0xff]
        %v397 = vld [vmem:[%s239 + $0x250] sm:$0xff]
        %v398 = vld [vmem:[%s239 + $0x258] sm:$0xff]
        %v399 = vld [vmem:[%s239 + $0x260] sm:$0xff]
        %v400 = vld [vmem:[%s239 + $0x268] sm:$0xff]
        %v401 = vld [vmem:[%s239 + $0x270] sm:$0xff]
        %v402 = vld [vmem:[%s239 + $0x278] sm:$0xff]
        %v403 = vld [vmem:[%s239 + $0x280] sm:$0xff]
        %v404 = vld [vmem:[%s239 + $0x288] sm:$0xff]
        %v405 = vld [vmem:[%s239 + $0x290] sm:$0xff]
        %v406 = vld [vmem:[%s239 + $0x298] sm:$0xff]
        %v407 = vld [vmem:[%s239 + $0x2a0] sm:$0xff]
        %v408 = vld [vmem:[%s239 + $0x2a8] sm:$0xff]
        %v409 = vld [vmem:[%s239 + $0x2b0] sm:$0xff]
        %v410 = vld [vmem:[%s239 + $0x2b8] sm:$0xff]
        %v411 = vld [vmem:[%s239 + $0x2c0] sm:$0xff]
        %v412 = vld [vmem:[%s239 + $0x2c8] sm:$0xff]
        %v413 = vld [vmem:[%s239 + $0x2d0] sm:$0xff]
        %v414 = vld [vmem:[%s239 + $0x2d8] sm:$0xff]
        %v415 = vld [vmem:[%s239 + $0x2e0] sm:$0xff]
        %v416 = vld [vmem:[%s239 + $0x2e8] sm:$0xff]
        %v417 = vld [vmem:[%s239 + $0x2f0] sm:$0xff]
        %v418 = vld [vmem:[%s239 + $0x2f8] sm:$0xff]
        %v419 = vld [vmem:[%s239 + $0x300] sm:$0xff]
        %v420 = vld [vmem:[%s239 + $0x308] sm:$0xff]
        %v421 = vld [vmem:[%s239 + $0x310] sm:$0xff]
        %v422 = vld [vmem:[%s239 + $0x318] sm:$0xff]
        %v423 = vld [vmem:[%s249] sm:$0xff]
        %v424 = vunpack.c.l.bf16 %v423
        %v425 = vunpack.c.h.bf16 %v423
        %v526 = vunpack.c.l.b16 %v323
        %v527 = vunpack.c.h.b16 %v323
        %v528 = vunpack.c.l.b16 %v324
        %v529 = vunpack.c.h.b16 %v324
        %v530 = vunpack.c.l.b16 %v325
        %v531 = vunpack.c.h.b16 %v325
        %v532 = vunpack.c.l.b16 %v326
        %v533 = vunpack.c.h.b16 %v326
        %v534 = vunpack.c.l.b16 %v327
        %v535 = vunpack.c.h.b16 %v327
        %v536 = vunpack.c.l.b16 %v328
        %v537 = vunpack.c.h.b16 %v328
        %v538 = vunpack.c.l.b16 %v329
        %v539 = vunpack.c.h.b16 %v329
        %v540 = vunpack.c.l.b16 %v330
        %v541 = vunpack.c.h.b16 %v330
        %v542 = vunpack.c.l.b16 %v331
        %v543 = vunpack.c.h.b16 %v331
        %v544 = vunpack.c.l.b16 %v332
        %v545 = vunpack.c.h.b16 %v332
        %v546 = vunpack.c.l.b16 %v333
        %v547 = vunpack.c.h.b16 %v333
        %v548 = vunpack.c.l.b16 %v334
        %v549 = vunpack.c.h.b16 %v334
        %v550 = vunpack.c.l.b16 %v335
        %v551 = vunpack.c.h.b16 %v335
        %v552 = vunpack.c.l.b16 %v336
        %v553 = vunpack.c.h.b16 %v336
        %v554 = vunpack.c.l.b16 %v337
        %v555 = vunpack.c.h.b16 %v337
        %v556 = vunpack.c.l.b16 %v338
        %v557 = vunpack.c.h.b16 %v338
        %v558 = vunpack.c.l.b16 %v339
        %v559 = vunpack.c.h.b16 %v339
        %v560 = vunpack.c.l.b16 %v340
        %v561 = vunpack.c.h.b16 %v340
        %v562 = vunpack.c.l.b16 %v341
        %v563 = vunpack.c.h.b16 %v341
        %v564 = vunpack.c.l.b16 %v342
        %v565 = vunpack.c.h.b16 %v342
        %v566 = vunpack.c.l.b16 %v343
        %v567 = vunpack.c.h.b16 %v343
        %v568 = vunpack.c.l.b16 %v344
        %v569 = vunpack.c.h.b16 %v344
        %v570 = vunpack.c.l.b16 %v345
        %v571 = vunpack.c.h.b16 %v345
        %v572 = vunpack.c.l.b16 %v346
        %v573 = vunpack.c.h.b16 %v346
        %v574 = vunpack.c.l.b16 %v347
        %v575 = vunpack.c.h.b16 %v347
        %v576 = vunpack.c.l.b16 %v348
        %v577 = vunpack.c.h.b16 %v348
        %v578 = vunpack.c.l.b16 %v349
        %v579 = vunpack.c.h.b16 %v349
        %v580 = vunpack.c.l.b16 %v350
        %v581 = vunpack.c.h.b16 %v350
        %v582 = vunpack.c.l.b16 %v351
        %v583 = vunpack.c.h.b16 %v351
        %v584 = vunpack.c.l.b16 %v352
        %v585 = vunpack.c.h.b16 %v352
        %v586 = vunpack.c.l.b16 %v353
        %v587 = vunpack.c.h.b16 %v353
        %v588 = vunpack.c.l.b16 %v354
        %v589 = vunpack.c.h.b16 %v354
        %v590 = vunpack.c.l.b16 %v355
        %v591 = vunpack.c.h.b16 %v355
        %v592 = vunpack.c.l.b16 %v356
        %v593 = vunpack.c.h.b16 %v356
        %v594 = vunpack.c.l.b16 %v357
        %v595 = vunpack.c.h.b16 %v357
        %v596 = vunpack.c.l.b16 %v358
        %v597 = vunpack.c.h.b16 %v358
        %v598 = vunpack.c.l.b16 %v359
        %v599 = vunpack.c.h.b16 %v359
        %v600 = vunpack.c.l.b16 %v360
        %v601 = vunpack.c.h.b16 %v360
        %v602 = vunpack.c.l.b16 %v361
        %v603 = vunpack.c.h.b16 %v361
        %v604 = vunpack.c.l.b16 %v362
        %v605 = vunpack.c.h.b16 %v362
        %v606 = vunpack.c.l.b16 %v363
        %v607 = vunpack.c.h.b16 %v363
        %v608 = vunpack.c.l.b16 %v364
        %v609 = vunpack.c.h.b16 %v364
        %v610 = vunpack.c.l.b16 %v365
        %v611 = vunpack.c.h.b16 %v365
        %v612 = vunpack.c.l.b16 %v366
        %v613 = vunpack.c.h.b16 %v366
        %v614 = vunpack.c.l.b16 %v367
        %v615 = vunpack.c.h.b16 %v367
        %v616 = vunpack.c.l.b16 %v368
        %v617 = vunpack.c.h.b16 %v368
        %v618 = vunpack.c.l.b16 %v369
        %v619 = vunpack.c.h.b16 %v369
        %v620 = vunpack.c.l.b16 %v370
        %v621 = vunpack.c.h.b16 %v370
        %v622 = vunpack.c.l.b16 %v371
        %v623 = vunpack.c.h.b16 %v371
        %v624 = vunpack.c.l.b16 %v372
        %v625 = vunpack.c.h.b16 %v372
        %v626 = vunpack.c.l.b16 %v373
        %v627 = vunpack.c.h.b16 %v373
        %v628 = vunpack.c.l.b16 %v374
        %v629 = vunpack.c.h.b16 %v374
        %v630 = vunpack.c.l.b16 %v375
        %v631 = vunpack.c.h.b16 %v375
        %v632 = vunpack.c.l.b16 %v376
        %v633 = vunpack.c.h.b16 %v376
        %v634 = vunpack.c.l.b16 %v377
        %v635 = vunpack.c.h.b16 %v377
        %v636 = vunpack.c.l.b16 %v378
        %v637 = vunpack.c.h.b16 %v378
        %v638 = vunpack.c.l.b16 %v379
        %v639 = vunpack.c.h.b16 %v379
        %v640 = vunpack.c.l.b16 %v380
        %v641 = vunpack.c.h.b16 %v380
        %v642 = vunpack.c.l.b16 %v381
        %v643 = vunpack.c.h.b16 %v381
        %v644 = vunpack.c.l.b16 %v382
        %v645 = vunpack.c.h.b16 %v382
        %v646 = vunpack.c.l.b16 %v383
        %v647 = vunpack.c.h.b16 %v383
        %v648 = vunpack.c.l.b16 %v384
        %v649 = vunpack.c.h.b16 %v384
        %v650 = vunpack.c.l.b16 %v385
        %v651 = vunpack.c.h.b16 %v385
        %v652 = vunpack.c.l.b16 %v386
        %v653 = vunpack.c.h.b16 %v386
        %v654 = vunpack.c.l.b16 %v387
        %v655 = vunpack.c.h.b16 %v387
        %v656 = vunpack.c.l.b16 %v388
        %v657 = vunpack.c.h.b16 %v388
        %v658 = vunpack.c.l.b16 %v389
        %v659 = vunpack.c.h.b16 %v389
        %v660 = vunpack.c.l.b16 %v390
        %v661 = vunpack.c.h.b16 %v390
        %v662 = vunpack.c.l.b16 %v391
        %v663 = vunpack.c.h.b16 %v391
        %v664 = vunpack.c.l.b16 %v392
        %v665 = vunpack.c.h.b16 %v392
        %v666 = vunpack.c.l.b16 %v393
        %v667 = vunpack.c.h.b16 %v393
        %v668 = vunpack.c.l.b16 %v394
        %v669 = vunpack.c.h.b16 %v394
        %v670 = vunpack.c.l.b16 %v395
        %v671 = vunpack.c.h.b16 %v395
        %v672 = vunpack.c.l.b16 %v396
        %v673 = vunpack.c.h.b16 %v396
        %v674 = vunpack.c.l.b16 %v397
        %v675 = vunpack.c.h.b16 %v397
        %v676 = vunpack.c.l.b16 %v398
        %v677 = vunpack.c.h.b16 %v398
        %v678 = vunpack.c.l.b16 %v399
        %v679 = vunpack.c.h.b16 %v399
        %v680 = vunpack.c.l.b16 %v400
        %v681 = vunpack.c.h.b16 %v400
        %v682 = vunpack.c.l.b16 %v401
        %v683 = vunpack.c.h.b16 %v401
        %v684 = vunpack.c.l.b16 %v402
        %v685 = vunpack.c.h.b16 %v402
        %v686 = vunpack.c.l.b16 %v403
        %v687 = vunpack.c.h.b16 %v403
        %v688 = vunpack.c.l.b16 %v404
        %v689 = vunpack.c.h.b16 %v404
        %v690 = vunpack.c.l.b16 %v405
        %v691 = vunpack.c.h.b16 %v405
        %v692 = vunpack.c.l.b16 %v406
        %v693 = vunpack.c.h.b16 %v406
        %v694 = vunpack.c.l.b16 %v407
        %v695 = vunpack.c.h.b16 %v407
        %v696 = vunpack.c.l.b16 %v408
        %v697 = vunpack.c.h.b16 %v408
        %v698 = vunpack.c.l.b16 %v409
        %v699 = vunpack.c.h.b16 %v409
        %v700 = vunpack.c.l.b16 %v410
        %v701 = vunpack.c.h.b16 %v410
        %v702 = vunpack.c.l.b16 %v411
        %v703 = vunpack.c.h.b16 %v411
        %v704 = vunpack.c.l.b16 %v412
        %v705 = vunpack.c.h.b16 %v412
        %v706 = vunpack.c.l.b16 %v413
        %v707 = vunpack.c.h.b16 %v413
        %v708 = vunpack.c.l.b16 %v414
        %v709 = vunpack.c.h.b16 %v414
        %v710 = vunpack.c.l.b16 %v415
        %v711 = vunpack.c.h.b16 %v415
        %v712 = vunpack.c.l.b16 %v416
        %v713 = vunpack.c.h.b16 %v416
        %v714 = vunpack.c.l.b16 %v417
        %v715 = vunpack.c.h.b16 %v417
        %v716 = vunpack.c.l.b16 %v418
        %v717 = vunpack.c.h.b16 %v418
        %v718 = vunpack.c.l.b16 %v419
        %v719 = vunpack.c.h.b16 %v419
        %v720 = vunpack.c.l.b16 %v420
        %v721 = vunpack.c.h.b16 %v420
        %v722 = vunpack.c.l.b16 %v421
        %v723 = vunpack.c.h.b16 %v421
        %v724 = vunpack.c.l.b16 %v422
        %v725 = vunpack.c.h.b16 %v422
        %v726 = vpack.c.b16 %v534, %v526
        %v727 = vpack.c.b16 %v535, %v527
        %v728 = vpack.c.b16 %v536, %v528
        %v729 = vpack.c.b16 %v537, %v529
        %v730 = vpack.c.b16 %v538, %v530
        %v731 = vpack.c.b16 %v539, %v531
        %v732 = vpack.c.b16 %v540, %v532
        %v733 = vpack.c.b16 %v541, %v533
        %v734 = vpack.c.b16 %v550, %v542
        %v735 = vpack.c.b16 %v551, %v543
        %v736 = vpack.c.b16 %v552, %v544
        %v737 = vpack.c.b16 %v553, %v545
        %v738 = vpack.c.b16 %v554, %v546
        %v739 = vpack.c.b16 %v555, %v547
        %v740 = vpack.c.b16 %v556, %v548
        %v741 = vpack.c.b16 %v557, %v549
        %v742 = vpack.c.b16 %v566, %v558
        %v743 = vpack.c.b16 %v567, %v559
        %v744 = vpack.c.b16 %v568, %v560
        %v745 = vpack.c.b16 %v569, %v561
        %v746 = vpack.c.b16 %v570, %v562
        %v747 = vpack.c.b16 %v571, %v563
        %v748 = vpack.c.b16 %v572, %v564
        %v749 = vpack.c.b16 %v573, %v565
        %v750 = vpack.c.b16 %v582, %v574
        %v751 = vpack.c.b16 %v583, %v575
        %v752 = vpack.c.b16 %v584, %v576
        %v753 = vpack.c.b16 %v585, %v577
        %v754 = vpack.c.b16 %v586, %v578
        %v755 = vpack.c.b16 %v587, %v579
        %v756 = vpack.c.b16 %v588, %v580
        %v757 = vpack.c.b16 %v589, %v581
        %v758 = vpack.c.b16 %v598, %v590
        %v759 = vpack.c.b16 %v599, %v591
        %v760 = vpack.c.b16 %v600, %v592
        %v761 = vpack.c.b16 %v601, %v593
        %v762 = vpack.c.b16 %v602, %v594
        %v763 = vpack.c.b16 %v603, %v595
        %v764 = vpack.c.b16 %v604, %v596
        %v765 = vpack.c.b16 %v605, %v597
        %v766 = vpack.c.b16 %v614, %v606
        %v767 = vpack.c.b16 %v615, %v607
        %v768 = vpack.c.b16 %v616, %v608
        %v769 = vpack.c.b16 %v617, %v609
        %v770 = vpack.c.b16 %v618, %v610
        %v771 = vpack.c.b16 %v619, %v611
        %v772 = vpack.c.b16 %v620, %v612
        %v773 = vpack.c.b16 %v621, %v613
        %v774 = vpack.c.b16 %v630, %v622
        %v775 = vpack.c.b16 %v631, %v623
        %v776 = vpack.c.b16 %v632, %v624
        %v777 = vpack.c.b16 %v633, %v625
        %v778 = vpack.c.b16 %v634, %v626
        %v779 = vpack.c.b16 %v635, %v627
        %v780 = vpack.c.b16 %v636, %v628
        %v781 = vpack.c.b16 %v637, %v629
        %v782 = vpack.c.b16 %v646, %v638
        %v783 = vpack.c.b16 %v647, %v639
        %v784 = vpack.c.b16 %v648, %v640
        %v785 = vpack.c.b16 %v649, %v641
        %v786 = vpack.c.b16 %v650, %v642
        %v787 = vpack.c.b16 %v651, %v643
        %v788 = vpack.c.b16 %v652, %v644
        %v789 = vpack.c.b16 %v653, %v645
        %v790 = vpack.c.b16 %v662, %v654
        %v791 = vpack.c.b16 %v663, %v655
        %v792 = vpack.c.b16 %v664, %v656
        %v793 = vpack.c.b16 %v665, %v657
        %v794 = vpack.c.b16 %v666, %v658
        %v795 = vpack.c.b16 %v667, %v659
        %v796 = vpack.c.b16 %v668, %v660
        %v797 = vpack.c.b16 %v669, %v661
        %v798 = vpack.c.b16 %v678, %v670
        %v799 = vpack.c.b16 %v679, %v671
        %v800 = vpack.c.b16 %v680, %v672
        %v801 = vpack.c.b16 %v681, %v673
        %v802 = vpack.c.b16 %v682, %v674
        %v803 = vpack.c.b16 %v683, %v675
        %v804 = vpack.c.b16 %v684, %v676
        %v805 = vpack.c.b16 %v685, %v677
        %v806 = vpack.c.b16 %v694, %v686
        %v807 = vpack.c.b16 %v695, %v687
        %v808 = vpack.c.b16 %v696, %v688
        %v809 = vpack.c.b16 %v697, %v689
        %v810 = vpack.c.b16 %v698, %v690
        %v811 = vpack.c.b16 %v699, %v691
        %v812 = vpack.c.b16 %v700, %v692
        %v813 = vpack.c.b16 %v701, %v693
        %v814 = vpack.c.b16 %v710, %v702
        %v815 = vpack.c.b16 %v711, %v703
        %v816 = vpack.c.b16 %v712, %v704
        %v817 = vpack.c.b16 %v713, %v705
        %v818 = vpack.c.b16 %v714, %v706
        %v819 = vpack.c.b16 %v715, %v707
        %v820 = vpack.c.b16 %v716, %v708
        %v821 = vpack.c.b16 %v717, %v709
        %v822 = vpack.c.b16 %v718, %v718
        %v823 = vpack.c.b16 %v719, %v719
        %v824 = vpack.c.b16 %v720, %v720
        %v825 = vpack.c.b16 %v721, %v721
        %v826 = vpack.c.b16 %v722, %v722
        %v827 = vpack.c.b16 %v723, %v723
        %v828 = vpack.c.b16 %v724, %v724
        %v829 = vpack.c.b16 %v725, %v725
        %v928 = vperm.slane %v424, 0
        %v929 = vperm.slane %v424, 2
        %v930 = vperm.slane %v424, 4
        %v931 = vperm.slane %v424, 6
        %v932 = vperm.slane %v425, 0
        %v933 = vperm.slane %v425, 2
        %v934 = vperm.slane %v425, 4
        %v935 = vperm.slane %v425, 6
        %v945 = vsel %vm300, %v322, 0
        %vm947 = vcmask 1043456
        %v949 = vsel %vm947, %v822, 0
        %v952 = vsel %vm947, %v823, 0
        %v955 = vsel %vm947, %v824, 0
        %v958 = vsel %vm947, %v825, 0
        %v961 = vsel %vm947, %v826, 0
        %v964 = vsel %vm947, %v827, 0
        %v967 = vsel %vm947, %v828, 0
        %v970 = vsel %vm947, %v829, 0
        %972 = vmatpush.bf16.msra.mxu0 %v782
        %973 = vmatpush.bf16.msra.mxu0 %v774
        %974 = vmatpush.bf16.msra.mxu0 %v766
        %975 = vmatpush.bf16.msra.mxu0 %v758
        %976 = vmatpush.bf16.msra.mxu0 %v750
        %977 = vmatpush.bf16.msra.mxu0 %v742
        %978 = vmatpush.bf16.msra.mxu0 %v734
        %979 = vmatpush.bf16.msra.mxu0 %v726
        %980 = vmatmul.bf16.gmra.mxu0 %v321
        %v981 = vpop.f32.mrf.mxu0
        %v982 = vadd.f32 %v928, %v981
        %v983 = vpop.f32.mrf.mxu0
        %984 = vdwg.mxu0
        %985 = vmatpush.bf16.msra.mxu0 0
        %986 = vmatpush.bf16.msra.mxu0 0
        %987 = vmatpush.bf16.msra.mxu0 0
        %988 = vmatpush.bf16.msra.mxu0 %v949
        %989 = vmatpush.bf16.msra.mxu0 %v814
        %990 = vmatpush.bf16.msra.mxu0 %v806
        %991 = vmatpush.bf16.msra.mxu0 %v798
        %992 = vmatpush.bf16.msra.mxu0 %v790
        %993 = vmatmul.bf16.gmra.mxu0 %v945
        %v994 = vpop.f32.mrf.mxu0
        %v995 = vadd.f32 %v982, %v994
        %v996 = vpop.f32.mrf.mxu0
        %997 = vdwg.mxu0
        %998 = vmatpush.bf16.msra.mxu0 %v783
        %999 = vmatpush.bf16.msra.mxu0 %v775
        %1000 = vmatpush.bf16.msra.mxu0 %v767
        %1001 = vmatpush.bf16.msra.mxu0 %v759
        %1002 = vmatpush.bf16.msra.mxu0 %v751
        %1003 = vmatpush.bf16.msra.mxu0 %v743
        %1004 = vmatpush.bf16.msra.mxu0 %v735
        %1005 = vmatpush.bf16.msra.mxu0 %v727
        %1006 = vmatmul.bf16.gmra.mxu0 %v321
        %v1007 = vpop.f32.mrf.mxu0
        %v1008 = vadd.f32 %v929, %v1007
        %v1009 = vpop.f32.mrf.mxu0
        %1010 = vdwg.mxu0
        %1011 = vmatpush.bf16.msra.mxu0 0
        %1012 = vmatpush.bf16.msra.mxu0 0
        %1013 = vmatpush.bf16.msra.mxu0 0
        %1014 = vmatpush.bf16.msra.mxu0 %v952
        %1015 = vmatpush.bf16.msra.mxu0 %v815
        %1016 = vmatpush.bf16.msra.mxu0 %v807
        %1017 = vmatpush.bf16.msra.mxu0 %v799
        %1018 = vmatpush.bf16.msra.mxu0 %v791
        %1019 = vmatmul.bf16.gmra.mxu0 %v945
        %v1020 = vpop.f32.mrf.mxu0
        %v1021 = vadd.f32 %v1008, %v1020
        %v1022 = vpop.f32.mrf.mxu0
        %1023 = vdwg.mxu0
        %1024 = vmatpush.bf16.msra.mxu0 %v784
        %1025 = vmatpush.bf16.msra.mxu0 %v776
        %1026 = vmatpush.bf16.msra.mxu0 %v768
        %1027 = vmatpush.bf16.msra.mxu0 %v760
        %1028 = vmatpush.bf16.msra.mxu0 %v752
        %1029 = vmatpush.bf16.msra.mxu0 %v744
        %1030 = vmatpush.bf16.msra.mxu0 %v736
        %1031 = vmatpush.bf16.msra.mxu0 %v728
        %1032 = vmatmul.bf16.gmra.mxu0 %v321
        %v1033 = vpop.f32.mrf.mxu0
        %v1034 = vadd.f32 %v930, %v1033
        %v1035 = vpop.f32.mrf.mxu0
        %1036 = vdwg.mxu0
        %1037 = vmatpush.bf16.msra.mxu0 0
        %1038 = vmatpush.bf16.msra.mxu0 0
        %1039 = vmatpush.bf16.msra.mxu0 0
        %1040 = vmatpush.bf16.msra.mxu0 %v955
        %1041 = vmatpush.bf16.msra.mxu0 %v816
        %1042 = vmatpush.bf16.msra.mxu0 %v808
        %1043 = vmatpush.bf16.msra.mxu0 %v800
        %1044 = vmatpush.bf16.msra.mxu0 %v792
        %1045 = vmatmul.bf16.gmra.mxu0 %v945
        %v1046 = vpop.f32.mrf.mxu0
        %v1047 = vadd.f32 %v1034, %v1046
        %v1048 = vpop.f32.mrf.mxu0
        %1049 = vdwg.mxu0
        %1050 = vmatpush.bf16.msra.mxu0 %v785
        %1051 = vmatpush.bf16.msra.mxu0 %v777
        %1052 = vmatpush.bf16.msra.mxu0 %v769
        %1053 = vmatpush.bf16.msra.mxu0 %v761
        %1054 = vmatpush.bf16.msra.mxu0 %v753
        %1055 = vmatpush.bf16.msra.mxu0 %v745
        %1056 = vmatpush.bf16.msra.mxu0 %v737
        %1057 = vmatpush.bf16.msra.mxu0 %v729
        %1058 = vmatmul.bf16.gmra.mxu0 %v321
        %v1059 = vpop.f32.mrf.mxu0
        %v1060 = vadd.f32 %v931, %v1059
        %v1061 = vpop.f32.mrf.mxu0
        %1062 = vdwg.mxu0
        %1063 = vmatpush.bf16.msra.mxu0 0
        %1064 = vmatpush.bf16.msra.mxu0 0
        %1065 = vmatpush.bf16.msra.mxu0 0
        %1066 = vmatpush.bf16.msra.mxu0 %v958
        %1067 = vmatpush.bf16.msra.mxu0 %v817
        %1068 = vmatpush.bf16.msra.mxu0 %v809
        %1069 = vmatpush.bf16.msra.mxu0 %v801
        %1070 = vmatpush.bf16.msra.mxu0 %v793
        %1071 = vmatmul.bf16.gmra.mxu0 %v945
        %v1072 = vpop.f32.mrf.mxu0
        %v1073 = vadd.f32 %v1060, %v1072
        %v1074 = vpop.f32.mrf.mxu0
        %1075 = vdwg.mxu0
        %1076 = vmatpush.bf16.msra.mxu0 %v786
        %1077 = vmatpush.bf16.msra.mxu0 %v778
        %1078 = vmatpush.bf16.msra.mxu0 %v770
        %1079 = vmatpush.bf16.msra.mxu0 %v762
        %1080 = vmatpush.bf16.msra.mxu0 %v754
        %1081 = vmatpush.bf16.msra.mxu0 %v746
        %1082 = vmatpush.bf16.msra.mxu0 %v738
        %1083 = vmatpush.bf16.msra.mxu0 %v730
        %1084 = vmatmul.bf16.gmra.mxu0 %v321
        %v1085 = vpop.f32.mrf.mxu0
        %v1086 = vadd.f32 %v932, %v1085
        %v1087 = vpop.f32.mrf.mxu0
        %1088 = vdwg.mxu0
        %1089 = vmatpush.bf16.msra.mxu0 0
        %1090 = vmatpush.bf16.msra.mxu0 0
        %1091 = vmatpush.bf16.msra.mxu0 0
        %1092 = vmatpush.bf16.msra.mxu0 %v961
        %1093 = vmatpush.bf16.msra.mxu0 %v818
        %1094 = vmatpush.bf16.msra.mxu0 %v810
        %1095 = vmatpush.bf16.msra.mxu0 %v802
        %1096 = vmatpush.bf16.msra.mxu0 %v794
        %1097 = vmatmul.bf16.gmra.mxu0 %v945
        %v1098 = vpop.f32.mrf.mxu0
        %v1099 = vadd.f32 %v1086, %v1098
        %v1100 = vpop.f32.mrf.mxu0
        %1101 = vdwg.mxu0
        %1102 = vmatpush.bf16.msra.mxu0 %v787
        %1103 = vmatpush.bf16.msra.mxu0 %v779
        %1104 = vmatpush.bf16.msra.mxu0 %v771
        %1105 = vmatpush.bf16.msra.mxu0 %v763
        %1106 = vmatpush.bf16.msra.mxu0 %v755
        %1107 = vmatpush.bf16.msra.mxu0 %v747
        %1108 = vmatpush.bf16.msra.mxu0 %v739
        %1109 = vmatpush.bf16.msra.mxu0 %v731
        %1110 = vmatmul.bf16.gmra.mxu0 %v321
        %v1111 = vpop.f32.mrf.mxu0
        %v1112 = vadd.f32 %v933, %v1111
        %v1113 = vpop.f32.mrf.mxu0
        %1114 = vdwg.mxu0
        %1115 = vmatpush.bf16.msra.mxu0 0
        %1116 = vmatpush.bf16.msra.mxu0 0
        %1117 = vmatpush.bf16.msra.mxu0 0
        %1118 = vmatpush.bf16.msra.mxu0 %v964
        %1119 = vmatpush.bf16.msra.mxu0 %v819
        %1120 = vmatpush.bf16.msra.mxu0 %v811
        %1121 = vmatpush.bf16.msra.mxu0 %v803
        %1122 = vmatpush.bf16.msra.mxu0 %v795
        %1123 = vmatmul.bf16.gmra.mxu0 %v945
        %v1124 = vpop.f32.mrf.mxu0
        %v1125 = vadd.f32 %v1112, %v1124
        %v1126 = vpop.f32.mrf.mxu0
        %1127 = vdwg.mxu0
        %1128 = vmatpush.bf16.msra.mxu0 %v788
        %1129 = vmatpush.bf16.msra.mxu0 %v780
        %1130 = vmatpush.bf16.msra.mxu0 %v772
        %1131 = vmatpush.bf16.msra.mxu0 %v764
        %1132 = vmatpush.bf16.msra.mxu0 %v756
        %1133 = vmatpush.bf16.msra.mxu0 %v748
        %1134 = vmatpush.bf16.msra.mxu0 %v740
        %1135 = vmatpush.bf16.msra.mxu0 %v732
        %1136 = vmatmul.bf16.gmra.mxu0 %v321
        %v1137 = vpop.f32.mrf.mxu0
        %v1138 = vadd.f32 %v934, %v1137
        %v1139 = vpop.f32.mrf.mxu0
        %1140 = vdwg.mxu0
        %1141 = vmatpush.bf16.msra.mxu0 0
        %1142 = vmatpush.bf16.msra.mxu0 0
        %1143 = vmatpush.bf16.msra.mxu0 0
        %1144 = vmatpush.bf16.msra.mxu0 %v967
        %1145 = vmatpush.bf16.msra.mxu0 %v820
        %1146 = vmatpush.bf16.msra.mxu0 %v812
        %1147 = vmatpush.bf16.msra.mxu0 %v804
        %1148 = vmatpush.bf16.msra.mxu0 %v796
        %1149 = vmatmul.bf16.gmra.mxu0 %v945
        %v1150 = vpop.f32.mrf.mxu0
        %v1151 = vadd.f32 %v1138, %v1150
        %v1152 = vpop.f32.mrf.mxu0
        %1153 = vdwg.mxu0
        %1154 = vmatpush.bf16.msra.mxu0 %v789
        %1155 = vmatpush.bf16.msra.mxu0 %v781
        %1156 = vmatpush.bf16.msra.mxu0 %v773
        %1157 = vmatpush.bf16.msra.mxu0 %v765
        %1158 = vmatpush.bf16.msra.mxu0 %v757
        %1159 = vmatpush.bf16.msra.mxu0 %v749
        %1160 = vmatpush.bf16.msra.mxu0 %v741
        %1161 = vmatpush.bf16.msra.mxu0 %v733
        %1162 = vmatmul.bf16.gmra.mxu0 %v321
        %v1163 = vpop.f32.mrf.mxu0
        %v1164 = vadd.f32 %v935, %v1163
        %v1165 = vpop.f32.mrf.mxu0
        %1166 = vdwg.mxu0
        %1167 = vmatpush.bf16.msra.mxu0 0
        %1168 = vmatpush.bf16.msra.mxu0 0
        %1169 = vmatpush.bf16.msra.mxu0 0
        %1170 = vmatpush.bf16.msra.mxu0 %v970
        %1171 = vmatpush.bf16.msra.mxu0 %v821
        %1172 = vmatpush.bf16.msra.mxu0 %v813
        %1173 = vmatpush.bf16.msra.mxu0 %v805
        %1174 = vmatpush.bf16.msra.mxu0 %v797
        %1175 = vmatmul.bf16.gmra.mxu0 %v945
        %v1176 = vpop.f32.mrf.mxu0
        %v1177 = vadd.f32 %v1164, %v1176
        %v1178 = vpop.f32.mrf.mxu0
        %1179 = vdwg.mxu0
        %v1188 = vrot.slane %v1021, 7
        %v1189 = vrot.slane %v1047, 6
        %v1190 = vrot.slane %v1073, 5
        %v1191 = vrot.slane %v1099, 4
        %v1192 = vrot.slane %v1125, 3
        %v1193 = vrot.slane %v1151, 2
        %v1194 = vrot.slane %v1177, 1
        %vm1195 = vcmask 1040384
        %v1196 = vsel %vm1195, %v995, %v1188
        %vm1197 = vcmask 1042434
        %v1198 = vsel %vm1197, %v1189, %v1190
        %v1199 = vsel %vm291, %v1196, %v1198
        %vm1200 = vcmask 1044484
        %v1201 = vsel %vm1200, %v1191, %v1192
        %vm1202 = vcmask 1046534
        %v1203 = vsel %vm1202, %v1193, %v1194
        %vm1204 = vcmask 1045508
        %v1205 = vsel %vm1204, %v1201, %v1203
        %v1206 = vsel %vm947, %v1199, %v1205
        %1208 = vst [vmem:[%s284] sm:$0xff] %v1206
        %s1209 = smul.u32 8, %s17
        %p1210 = scmp.lt.s32.totalorder %s1209, 15
        %s1211 = scalar_select %p1210, %s1209, 15
        %s1212 = scalar_lea.vmem %s4, %s1211
        // Predicated region
        $region53: #{variable_network.1} parent=35 // pred_check
          %p1213 = pneg %p129
        $region54: #{variable_network.1} parent=35 // pred_check_branch
          %1215 = sbr.rel (%p1213) target = $region56
        $region55: #{variable_network.1} parent=35 // pred_region
          %s1216 = smul.u32 8, %s17
        $region56: #{variable_network.1} parent=35 // pred_fallthru
          _
      $region36: #{variable_network.1} parent=5 // pred_fallthru
        _
      %p1217 = scmp.le.s32.totalorder 2, %s12
      // Predicated region
      $region57: #{variable_network.1} parent=5 // pred_check
        %p1218 = pneg %p1217
      $region58: #{variable_network.1} parent=5 // pred_check_branch
        %1220 = sbr.rel (%p1218) target = $region60
      $region59: #{variable_network.1} parent=5 // pred_region
        %s1221 = ssub.s32 %s12, 2
        // Predicated region
        $region61: #{variable_network.1} parent=59 // pred_check
          %p1222 = pneg %p135
        $region62: #{variable_network.1} parent=59 // pred_check_branch
          %1224 = sbr.rel (%p1222) target = $region64
        $region63: #{variable_network.1} parent=59 // pred_region
          %s1225 = smul.u32 8, %s18
          %p1226 = scmp.lt.s32.totalorder %s1225, 15
          %s1227 = scalar_select %p1226, %s1225, 15
          %s1228 = scalar_lea.vmem %s4, %s1227
        $region64: #{variable_network.1} parent=59 // pred_fallthru
          _
      $region60: #{variable_network.1} parent=5 // pred_fallthru
        _
    $region6: #{variable_network.1} parent=1 // loop_footer
      %s16 = sadd.s32 1, %s12
    $region7: #{variable_network.1} parent=1 // loop_footer_branch
      %11 = sbr.rel target = $region3
    $region8: #{variable_network.1} parent=1 // loop_exit
      _
    %1229 = vsyncpa [#allocation3], 1
    %s1230 = scalar_lea.sflag [#allocation3], 1
    %1231 = vsyncpa %s1230, 1
    %1232 = vsyncpa [#allocation5], 1

</llo_original>
